<compile_context>
chip_gen: v6e
topology: v6e:2x2x1
jax: 0.10.0
libtpu: 0.0.40
codegen_flags: <defaults>
</compile_context>

<pallas_src>
from functools import partial

import jax
import jax.numpy as jnp
from jax.experimental import pallas as pl
from jax.experimental.pallas import tpu as pltpu


def _round_up(x, m):
    return -(-x // m) * m


def _vmem_capacity_bytes():
    try:
        info = pltpu.get_tpu_info()
        cap = getattr(info, "vmem_capacity_bytes", None)
        if cap:
            return int(cap)
    except Exception:
        pass
    return 64 << 20   # conservative (v7x per-TC VMEM)


def _pick_lane_tile(hw, max_bytes, bytes_per_col):
    """Largest multiple-of-128 lane tile within a byte budget.
    Returns (tile, padded_hw); padded_hw > hw only in the no-divisor fallback."""
    max_cols = max(128, (max_bytes // max(bytes_per_col, 1)) // 128 * 128)
    if hw <= max_cols:
        return hw, hw
    t = max_cols
    while t >= 128:
        if hw % t == 0:
            return t, hw
        t -= 128
    return max_cols, _round_up(hw, max_cols)


# --------------------------------------------------------------------------
# Kernel 1: alpha activation
#   out[:, 0]   = 1.0
#   out[:, p>0] = (tanh(conv_out[:, p-1] + alpha_bias[p-1]) + 1) * 0.5
# Layout: per-batch block of (n_plane, lane_tile), HW on the lane axis.
# --------------------------------------------------------------------------
def _activate_alpha_kernel(conv_ref, bias_ref, out_ref):
    # conv_ref: (P-1, TL)   bias_ref: (P-1, 1) f32   out_ref: (P, TL)
    tl = out_ref.shape[1]
    act = (jnp.tanh(conv_ref[...].astype(jnp.float32) + bias_ref[...]) + 1.0) * 0.5
    full = jnp.concatenate([jnp.ones((1, tl), jnp.float32), act], axis=0)  # (P, TL)
    out_ref[...] = full.astype(out_ref.dtype)


def activate_alpha_pallas(conv_out, alpha_bias_col, img_size, block_bytes=6 << 20):
    """conv_out: (B, P-1, 1, H, W); alpha_bias_col: (P-1, 1).
    Returns alpha: (B, P, 1, H, W) with plane 0 == 1. Output dtype follows input."""
    h, w = img_size
    b, pm1 = conv_out.shape[0], conv_out.shape[1]
    n_plane = pm1 + 1
    hw = h * w
    out_dtype = conv_out.dtype
    item = jnp.dtype(out_dtype).itemsize

    conv3 = conv_out.reshape(b, pm1, hw)                  # lane-dense
    bias = alpha_bias_col.astype(jnp.float32)             # (P-1, 1) tiny

    # HBM in + HBM out + f32 temporaries, per output column.
    bytes_per_col = (pm1 + n_plane) * item + 2 * n_plane * 4
    tl, hw_pad = _pick_lane_tile(hw, block_bytes, bytes_per_col)
    if hw_pad != hw:
        conv3 = jnp.pad(conv3, ((0, 0), (0, 0), (0, hw_pad - hw)))
    n_lane_tiles = hw_pad // tl

    cap = _vmem_capacity_bytes()
    footprint = 2 * (pm1 + n_plane) * tl * item + 2 * n_plane * tl * 4 + (1 << 20)
    vmem_limit = int(min(max(footprint, 16 << 20), int(0.75 * cap)))

    out = pl.pallas_call(
        _activate_alpha_kernel,
        out_shape=jax.ShapeDtypeStruct((b, n_plane, hw_pad), out_dtype),
        grid=(b, n_lane_tiles),
        in_specs=[
            pl.BlockSpec((None, pm1, tl), lambda i, j: (i, 0, j)),
            pl.BlockSpec((pm1, 1), lambda i, j: (0, 0)),
        ],
        out_specs=pl.BlockSpec((None, n_plane, tl), lambda i, j: (i, 0, j)),
        compiler_params=pltpu.CompilerParams(
            dimension_semantics=("parallel", "parallel"),
            vmem_limit_bytes=vmem_limit),
    )(conv3, bias)
    if hw_pad != hw:
        out = out[..., :hw]
    return out.reshape(b, n_plane, 1, h, w)


# --------------------------------------------------------------------------
# Kernel 2: bilinear grid_sample, padding_mode='border', align_corners=True.
# Separable tent weights: one MXU matmul over Wi (M = C*Hi rows), then VPU
# weighting by wy and a sublane reduce over Hi. Lane-dense (C, TP) output,
# (2, TP) coordinates, image resident across the P-tile grid axis.
# --------------------------------------------------------------------------
def _grid_sample_kernel(img_ref, coord_ref, out_ref, *, hi, wi, c, use_bf16):
    # img_ref: (C*Hi_pad, Wi)   coord_ref: (2, TP)   out_ref: (C, TP)
    hi_pad = img_ref.shape[0] // c
    tp = coord_ref.shape[1]

    x = coord_ref[0:1, :].astype(jnp.float32)                  # (1, TP)
    y = coord_ref[1:2, :].astype(jnp.float32)                  # (1, TP)
    # align_corners=True unnormalization + border clamp of the sample coords.
    ix = jnp.clip((x + 1.0) * (0.5 * (wi - 1)), 0.0, float(wi - 1))
    iy = jnp.clip((y + 1.0) * (0.5 * (hi - 1)), 0.0, float(hi - 1))

    # Separable bilinear tent weights (exactly reproduces the 4-corner formula;
    # weights on padded Hi rows are identically zero since |h - iy| >= 1).
    wq = jax.lax.broadcasted_iota(jnp.int32, (wi, tp), 0).astype(jnp.float32)
    hq = jax.lax.broadcasted_iota(jnp.int32, (hi_pad, tp), 0).astype(jnp.float32)
    wx = jnp.maximum(1.0 - jnp.abs(wq - ix), 0.0)              # (Wi, TP)
    wy = jnp.maximum(1.0 - jnp.abs(hq - iy), 0.0)              # (Hi_pad, TP)

    img = img_ref[...]
    if use_bf16:
        if img.dtype != jnp.bfloat16:
            img = img.astype(jnp.bfloat16)
        wx = wx.astype(jnp.bfloat16)
    elif img.dtype != jnp.float32:
        img = img.astype(jnp.float32)

    # Stage 1 (MXU): contract over Wi, near-full M utilization (C*Hi rows).
    tmp = jax.lax.dot_general(
        img, wx, dimension_numbers=(((1,), (0,)), ((), ())),
        preferred_element_type=jnp.float32)                    # (C*Hi_pad, TP)
    # Stage 2 (VPU + XLU): weight by wy (f32) and reduce over Hi.
    tmp = tmp.reshape(c, hi_pad, tp)
    out = jnp.sum(tmp * wy[None, :, :], axis=1)                # (C, TP)
    out_ref[...] = out.astype(out_ref.dtype)


def grid_sample_pallas(inp, grid, *, p_tile=None, use_bf16_matmul=True):
    """inp: (N, C, Hi, Wi), grid: (N, Ho, Wo, 2) -> (N, C, Ho, Wo).
    Matches F.grid_sample(mode='bilinear', padding_mode='border',
    align_corners=True). Output dtype follows input dtype."""
    n, c, hi, wi = inp.shape
    _, ho, wo, _ = grid.shape
    p = ho * wo
    out_dtype = inp.dtype
    img_item = jnp.dtype(inp.dtype).itemsize
    out_item = jnp.dtype(out_dtype).itemsize

    # Pad Hi to a multiple of 8 so the in-kernel (C*Hi, TP) -> (C, Hi, TP)
    # reshape is layout-preserving (padded rows get zero tent weight).
    hi_pad = _round_up(hi, 8)
    if hi_pad != hi:
        inp = jnp.pad(inp, ((0, 0), (0, 0), (0, hi_pad - hi), (0, 0)))
    img_flat = inp.reshape(n, c * hi_pad, wi)                      # (N, C*Hi, Wi)

    coords = jnp.transpose(grid.reshape(n, p, 2).astype(jnp.float32),
                           (0, 2, 1))                              # (N, 2, P) lane-dense

    wbytes = 2 if use_bf16_matmul else 4
    # per-output-column VMEM: wx + wy + matmul result + weighted product +
    # double-buffered coord/output blocks.
    per_col = (wi * wbytes + hi_pad * 4 + 2 * c * hi_pad * 4
               + 2 * 2 * 4 + 2 * c * out_item)
    cap = _vmem_capacity_bytes()
    col_budget = max(4 << 20, cap // 6)        # bigger tiles on 128 MiB parts
    tp = max(128, (col_budget // per_col) // 128 * 128)
    tp = min(tp, _round_up(p, 128))
    if p_tile is not None:
        tp = min(tp, max(128, _round_up(p_tile, 128)))
    p_pad = _round_up(p, tp)
    if p_pad != p:
        coords = jnp.pad(coords, ((0, 0), (0, 0), (0, p_pad - p)))
    num_p_tiles = p_pad // tp

    # TODO(synk): for images whose resident (C*Hi, Wi) slab approaches VMEM
    # capacity, switch to a manual-DMA row-gather path
    # (memory_space=pl.ANY + pltpu.make_async_copy) instead of a resident image.
    footprint = 2 * c * hi_pad * wi * img_item + per_col * tp + (4 << 20)
    vmem_limit = int(min(max(footprint, 32 << 20), int(0.75 * cap)))

    out = pl.pallas_call(
        partial(_grid_sample_kernel, hi=hi, wi=wi, c=c, use_bf16=use_bf16_matmul),
        out_shape=jax.ShapeDtypeStruct((n, c, p_pad), out_dtype),
        grid=(n, num_p_tiles),
        in_specs=[
            # image block index constant across the P axis -> stays resident
            pl.BlockSpec((None, c * hi_pad, wi), lambda i, j: (i, 0, 0)),
            pl.BlockSpec((None, 2, tp), lambda i, j: (i, 0, j)),
        ],
        out_specs=pl.BlockSpec((None, c, tp), lambda i, j: (i, 0, j)),
        compiler_params=pltpu.CompilerParams(
            # batch "parallel" / P-tile "arbitrary": each megacore keeps its
            # own image resident instead of both re-DMAing the same image.
            dimension_semantics=("parallel", "arbitrary"),
            vmem_limit_bytes=vmem_limit),
    )(img_flat, coords)

    if p_pad != p:
        out = out[..., :p]
    return out.reshape(n, c, ho, wo)          # pure reshape, no transpose needed


# --------------------------------------------------------------------------
# Kernel 3: denormalize_rgb  (t + 1) * 0.5  — lane-dense blocks.
# --------------------------------------------------------------------------
def _denorm_kernel(x_ref, o_ref):
    o_ref[...] = ((x_ref[...].astype(jnp.float32) + 1.0) * 0.5).astype(o_ref.dtype)


def denormalize_rgb_pallas(x, block_bytes=4 << 20):
    """x: (B, C, H, W) -> (B, C, H, W) in [0, 1]."""
    # TODO(synk): in the full flow this trivial pass should be fused into its
    # producer (or left to XLA inside the surrounding jit) to avoid an extra
    # HBM round-trip; kept standalone here because BaseMPI exposes it as one.
    b, c, h, w = x.shape
    rows, cols = b * c, h * w
    item = jnp.dtype(x.dtype).itemsize
    xf = x.reshape(rows, cols)

    bytes_per_col = 2 * rows * item
    tc, cols_pad = _pick_lane_tile(cols, block_bytes, bytes_per_col)
    if cols_pad != cols:
        xf = jnp.pad(xf, ((0, 0), (0, cols_pad - cols)))

    cap = _vmem_capacity_bytes()
    footprint = 2 * 2 * rows * tc * item + (1 << 20)
    vmem_limit = int(min(max(footprint, 8 << 20), int(0.75 * cap)))

    out = pl.pallas_call(
        _denorm_kernel,
        out_shape=jax.ShapeDtypeStruct((rows, cols_pad), x.dtype),
        grid=(cols_pad // tc,),
        in_specs=[pl.BlockSpec((rows, tc), lambda j: (0, j))],
        out_specs=pl.BlockSpec((rows, tc), lambda j: (0, j)),
        compiler_params=pltpu.CompilerParams(
            dimension_semantics=("parallel",),
            vmem_limit_bytes=vmem_limit),
    )(xf)
    if cols_pad != cols:
        out = out[:, :cols]
    return out.reshape(b, c, h, w)


# --------------------------------------------------------------------------
# BaseMPI equivalent (buffer / parameter setup is plain-JAX glue).
# --------------------------------------------------------------------------
class BaseMPIPallas:
    def __init__(self, n_plane, n_channels, img_size, num_frames=2,
                 flow_dof=-1, normalize=True):
        self.num_frames = num_frames
        self.n_plane = n_plane
        self.n_channels = n_channels
        self.img_size = tuple(img_size)
        if flow_dof == -1:
            self.flow_dof = 2
            self.dense_flow = True
        else:
            self.flow_dof = flow_dof
            self.dense_flow = False
        self.normalize = normalize
        self.rgb_range = (-1, 1) if normalize else (0, 1)
        self._register_alpha_bias()
        self._register_theta_bias()

    def _register_alpha_bias(self):
        p, (h, w) = self.n_plane, self.img_size
        alpha = 1.0 / jnp.arange(1, p + 1, dtype=jnp.float32)          # (P,)
        alpha = jnp.arctanh(2.0 * alpha - 1.0)
        # Compact per-plane bias consumed by the kernel (spatially constant).
        self.alpha_bias_col = alpha[1:].reshape(p - 1, 1)
        # Full buffer kept only for parity with the torch registered buffer.
        self.alpha_bias = jnp.broadcast_to(
            alpha[1:].reshape(p - 1, 1, 1, 1), (p - 1, 1, h, w))

    def _register_theta_bias(self):
        theta = jnp.array([[1, 0, 0], [0, 1, 0]], dtype=jnp.float32)
        self.theta_bias = jnp.broadcast_to(theta.reshape(1, 2, 3),
                                           (self.n_plane, 2, 3))

    def _denormalize_rgb(self, t):
        if self.normalize:
            return t                      # identity branch of the torch lambda
        return denormalize_rgb_pallas(t)

    def _activate_alpha(self, conv_out):
        return activate_alpha_pallas(conv_out, self.alpha_bias_col, self.img_size)

    @staticmethod
    def apply_warp_op(warp_in_layers, mpi_features, use_bf16_matmul=True):
        b, l = warp_in_layers.shape[:2]
        inp = warp_in_layers.reshape((b * l,) + warp_in_layers.shape[2:])
        grid = mpi_features['coordinates']
        grid = grid.reshape((b * l,) + grid.shape[2:])
        out = grid_sample_pallas(inp, grid, use_bf16_matmul=use_bf16_matmul)
        return out.reshape((b, l) + out.shape[1:])

    def forward(self, prev_images, gt_features=None):
        raise NotImplementedError   # same as the torch module


# --------------------------------------------------------------------------
# Pure-JAX reference grid_sample (border padding, align_corners=True) — test only.
# --------------------------------------------------------------------------
def _ref_grid_sample(inp, grid):
    n, c, hi, wi = inp.shape
    x, y = grid[..., 0], grid[..., 1]
    ix = jnp.clip((x + 1.0) * 0.5 * (wi - 1), 0.0, wi - 1)
    iy = jnp.clip((y + 1.0) * 0.5 * (hi - 1), 0.0, hi - 1)
    x0f, y0f = jnp.floor(ix), jnp.floor(iy)
    wx1, wy1 = ix - x0f, iy - y0f
    x0 = jnp.clip(x0f.astype(jnp.int32), 0, wi - 1)
    y0 = jnp.clip(y0f.astype(jnp.int32), 0, hi - 1)
    x1 = jnp.clip(x0 + 1, 0, wi - 1)
    y1 = jnp.clip(y0 + 1, 0, hi - 1)
    bidx = jnp.arange(n)[:, None, None]

    def gather(yy, xx):
        return inp[bidx, :, yy, xx]            # (N, Ho, Wo, C)

    wx1e, wy1e = wx1[..., None], wy1[..., None]
    out = (gather(y0, x0) * (1 - wy1e) * (1 - wx1e)
           + gather(y0, x1) * (1 - wy1e) * wx1e
           + gather(y1, x0) * wy1e * (1 - wx1e)
           + gather(y1, x1) * wy1e * wx1e)
    return jnp.transpose(out, (0, 3, 1, 2))    # (N, C, Ho, Wo)


if __name__ == "__main__":
    key = jax.random.PRNGKey(0)
    B, n_plane, C, H, W = 2, 4, 3, 16, 16
    L = n_plane

    mpi = BaseMPIPallas(n_plane=n_plane, n_channels=C, img_size=(H, W),
                        num_frames=2, flow_dof=-1, normalize=False)

    k1, k2, k3, k4 = jax.random.split(key, 4)
    conv_out = jax.random.normal(k1, (B, n_plane - 1, 1, H, W), jnp.float32)
    warp_in = jax.random.normal(k2, (B, L, C, H, W), jnp.float32)
    coords = jax.random.uniform(k3, (B, L, H, W, 2), jnp.float32,
                                minval=-1.1, maxval=1.1)   # exercise border clamp
    rgb = jax.random.uniform(k4, (B, C, H, W), jnp.float32,
                             minval=-1.0, maxval=1.0)

    alpha = mpi._activate_alpha(conv_out)
    warped = BaseMPIPallas.apply_warp_op(warp_in, {'coordinates': coords})
    rgb_dn = mpi._denormalize_rgb(rgb)
    jax.block_until_ready((alpha, warped, rgb_dn))

    # --- shape checks ---
    assert alpha.shape == (B, n_plane, 1, H, W)
    assert warped.shape == (B, L, C, H, W)
    assert rgb_dn.shape == (B, C, H, W)

    # --- alpha numerics ---
    ref_alpha = (jnp.tanh(conv_out.reshape(B, n_plane - 1, H, W)
                          + mpi.alpha_bias_col.reshape(1, n_plane - 1, 1, 1))
                 + 1.0) * 0.5
    assert bool(jnp.allclose(alpha[:, 0], 1.0))
    assert bool(jnp.allclose(alpha[:, 1:, 0], ref_alpha, atol=1e-5, rtol=1e-5))
    # dtype-preserving activation for a bf16 pipeline
    alpha_bf16 = mpi._activate_alpha(conv_out.astype(jnp.bfloat16))
    assert alpha_bf16.dtype == jnp.bfloat16

    # --- warp numerics: bf16-MXU default (loose tol) + f32 path (tight tol) ---
    ref_w = _ref_grid_sample(warp_in.reshape(B * L, C, H, W),
                             coords.reshape(B * L, H, W, 2))
    assert bool(jnp.allclose(warped.reshape(B * L, C, H, W), ref_w,
                             atol=3e-2, rtol=3e-2))
    warped_f32 = grid_sample_pallas(warp_in.reshape(B * L, C, H, W),
                                    coords.reshape(B * L, H, W, 2),
                                    use_bf16_matmul=False)
    assert bool(jnp.allclose(warped_f32, ref_w, atol=1e-4, rtol=1e-4))

    # --- denormalize ---
    assert bool(jnp.allclose(rgb_dn, (rgb + 1.0) * 0.5, atol=1e-6))

    # --- non-128-aligned output-point count (P padding path) + bf16 dtype ---
    Hi2, Wi2, Ho2, Wo2 = 16, 16, 10, 10
    img2 = jax.random.normal(k1, (2, C, Hi2, Wi2), jnp.bfloat16)
    grid2 = jax.random.uniform(k2, (2, Ho2, Wo2, 2), jnp.float32,
                               minval=-1.2, maxval=1.2)
    out2 = grid_sample_pallas(img2, grid2)
    jax.block_until_ready(out2)
    assert out2.shape == (2, C, Ho2, Wo2)
    assert out2.dtype == jnp.bfloat16
    ref2 = _ref_grid_sample(img2.astype(jnp.float32), grid2)
    assert bool(jnp.allclose(out2.astype(jnp.float32), ref2, atol=3e-2, rtol=3e-2))

    print("KERNEL_OK")
</pallas_src>

<mosaic_0001>
module attributes {stable_mosaic.version = 11 : i64} {
  func.func @_activate_alpha_kernel(%arg0: i32, %arg1: i32, %arg2: memref<1x3x256xf32, #tpu.memory_space<vmem>>, %arg3: memref<3x1xf32, #tpu.memory_space<vmem>>, %arg4: memref<1x4x256xf32, #tpu.memory_space<vmem>>) attributes {dimension_semantics = [#tpu.dimension_semantics<parallel>, #tpu.dimension_semantics<parallel>], iteration_bounds = array<i64: 2, 1>, scalar_prefetch = 0 : i64, scratch_operands = 0 : i64, tpu.core_type = #tpu.core_type<tc>, window_params = [{transform_indices = @transform_0, window_bounds = array<i64: 1, 3, 256>}, {pipeline_mode = #tpu.pipeline_mode<synchronous>, transform_indices = @transform_1, window_bounds = array<i64: 3, 1>}, {transform_indices = @transform_2, window_bounds = array<i64: 1, 4, 256>}]} {
    %c0 = arith.constant 0 : index
    %c0_0 = arith.constant 0 : index
    %c0_1 = arith.constant 0 : index
    %0 = vector.load %arg2[%c0, %c0_0, %c0_1] : memref<1x3x256xf32, #tpu.memory_space<vmem>>, vector<1x3x256xf32>
    %1 = vector.shape_cast %0 : vector<1x3x256xf32> to vector<3x256xf32>
    %c0_2 = arith.constant 0 : index
    %c0_3 = arith.constant 0 : index
    %2 = vector.load %arg3[%c0_2, %c0_3] : memref<3x1xf32, #tpu.memory_space<vmem>>, vector<3x1xf32>
    %3 = vector.broadcast %2 : vector<3x1xf32> to vector<3x256xf32>
    %4 = arith.addf %1, %3 : vector<3x256xf32>
    %5 = math.tanh %4 : vector<3x256xf32>
    %cst = arith.constant 1.000000e+00 : f32
    %6 = vector.broadcast %cst : f32 to vector<3x256xf32>
    %7 = arith.addf %5, %6 : vector<3x256xf32>
    %cst_4 = arith.constant 5.000000e-01 : f32
    %8 = vector.broadcast %cst_4 : f32 to vector<3x256xf32>
    %9 = arith.mulf %7, %8 : vector<3x256xf32>
    %cst_5 = arith.constant 1.000000e+00 : f32
    %10 = vector.broadcast %cst_5 : f32 to vector<1x256xf32>
    %11 = tpu.concatenate %10, %9 in 0 : vector<1x256xf32>, vector<3x256xf32> -> vector<4x256xf32>
    %c0_6 = arith.constant 0 : index
    %c0_7 = arith.constant 0 : index
    %c0_8 = arith.constant 0 : index
    %12 = vector.load %arg4[%c0_6, %c0_7, %c0_8] : memref<1x4x256xf32, #tpu.memory_space<vmem>>, vector<1x4x256xf32>
    %13 = vector.shape_cast %12 : vector<1x4x256xf32> to vector<4x256xf32>
    %14 = vector.shape_cast %11 : vector<4x256xf32> to vector<1x4x256xf32>
    tpu.vector_store %arg4[%c0_6, %c0_7, %c0_8], %14 {strides = array<i32>} : memref<1x4x256xf32, #tpu.memory_space<vmem>>, vector<1x4x256xf32>,
    return
  }
  func.func @transform_0(%arg0: i32, %arg1: i32) -> (i32, i32, i32) {
    %c0_i32 = arith.constant 0 : i32
    %c0_i32_0 = arith.constant 0 : i32
    return %arg0, %c0_i32, %arg1 : i32, i32, i32
  }
  func.func @transform_1(%arg0: i32, %arg1: i32) -> (i32, i32) {
    %c0_i32 = arith.constant 0 : i32
    %c0_i32_0 = arith.constant 0 : i32
    %c0_i32_1 = arith.constant 0 : i32
    return %c0_i32, %c0_i32_0 : i32, i32
  }
  func.func @transform_2(%arg0: i32, %arg1: i32) -> (i32, i32, i32) {
    %c0_i32 = arith.constant 0 : i32
    %c0_i32_0 = arith.constant 0 : i32
    return %arg0, %c0_i32, %arg1 : i32, i32, i32
  }
}

</mosaic_0001>

<llo_original>
// kernel: tpu_custom_call.1
$region0: #{tpu_custom_call.1}
  #allocation0 [shape = 'u32[]', space=smem, size = 0x4, offset = 0x4, fixed_abs, tag = 'smem constant byte address 0x4 - core index']
  #allocation1 [shape = 'u32[144,128]{1,0:T(1,128)}', space=vmem, size = 0x12000, scoped, tag = 'internal scratch']
  %s0 = inlined_call_operand.vmem [shape: f32[2,3,256], index: 0, kind: input, shape index: {}]
  %s1 = inlined_call_operand.vmem [shape: f32[3,1], index: 1, kind: input, shape index: {}]
  %s2 = inlined_call_operand.hbm [shape: f32[2,4,256], index: 2, kind: output, shape index: {}]
  %s3 = sld [smem:[#allocation0]]
  $region41: #{tpu_custom_call.1} parent=0
    _
  %s5 = ssub.s32 1, %s3
  %s6 = scalar_select 0, %s5, %s3
  $region1: #{tpu_custom_call.1} parent=0
    #allocation2 [shape = 'u8[8192]{0}', space=vmem, size = 0x2000, scoped, tag = 'output window, operand 0']
    #allocation3 [shape = 's32[2]{0}', space=sflag, size = 0x8, scoped, tag = 'scoped memory for tpu_custom_call.1']
    %7 = vsyncpa [#allocation3], 0
    %s8 = scalar_lea.sflag [#allocation3], 1
    %9 = vsyncpa %s8, 0
    loop: start=0, step=1, limit=4
    $region2: #{tpu_custom_call.1} parent=1 // loop_pre_header
      _
    $region3: #{tpu_custom_call.1} parent=1 // loop_header
      %s11 = sphi 0, %s15
      %p12 = scmp.ge.s32.totalorder %s11, 4
      %s18 = sphi 0, %s30
      %s19 = sphi 0, %s26
      %s20 = sphi 0, %s18
      %s21 = sphi 0, %s19
      %s22 = sphi 0, %s20
      %s23 = sphi 0, %s21
      %s35 = sphi 0, %s37
      %s38 = sphi 0, %s35
      %s39 = sphi 0, %s38
      %s55 = sphi 0, %s39
      %s59 = sphi 0, %s59
      %s61 = sphi 0, %s59
      %s62 = sphi 0, %s61
      %s76 = sphi 0, %s62
      %s84 = sphi 0, %s86
      %s87 = sphi 0, %s84
      %s88 = sphi 0, %s87
      %s104 = sphi 0, %s88
    $region4: #{tpu_custom_call.1} parent=1 // loop_header_branch
      %14 = sbr.rel (%p12) target = $region8
    $region5: #{tpu_custom_call.1} parent=1 // loop_body
      %s16 = ssub.s32 %s11, 1
      %s17 = ssub.s32 %s11, 2
      %s24 = sadd.s32 1, %s19
      %p25 = scmp.ge.s32.totalorder %s24, 1
      %s26 = scalar_select %p25, 0, %s24
      %s27 = sadd.s32 1, %s18
      %s28 = scalar_select %p25, %s27, %s18
      %p29 = scmp.ge.s32.totalorder %s28, 2
      %s30 = scalar_select %p29, 0, %s28
      %s31 = ssub.s32 %s18, %s30
      %s32 = ssub.s32 %s19, %s26
      %s33 = sor.u32 %s31, %s32
      %p34 = scmp.eq.s32.totalorder %s33, 0
      %s36 = sadd.s32 %s35, 1
      %s37 = scalar_select %p34, %s35, %s36
      %p40 = pneg %p34
      %p41 = scmp.eq.s32.totalorder %s11, 1
      %p42 = por %p40, %p41
      %p43 = scmp.ne.s32.totalorder %s35, %s38
      %p44 = scmp.eq.s32.totalorder %s11, 0
      %p45 = por %p43, %p44
      %p46 = scmp.ne.s32.totalorder %s35, %s38
      %p47 = scmp.eq.s32.totalorder %s16, 1
      %p48 = por %p46, %p47
      %p49 = scmp.ne.s32.totalorder %s38, %s39
      %p50 = scmp.eq.s32.totalorder %s16, 0
      %p51 = por %p49, %p50
      %p52 = scmp.ne.s32.totalorder %s38, %s39
      %p53 = scmp.eq.s32.totalorder %s17, 1
      %p54 = por %p52, %p53
      %p56 = scmp.ne.s32.totalorder %s39, %s55
      %p57 = scmp.eq.s32.totalorder %s17, 0
      %p58 = por %p56, %p57
      %s60 = sadd.s32 %s59, 1
      %p63 = scmp.eq.s32.totalorder %s11, 1
      %p64 = scmp.ne.s32.totalorder %s59, %s61
      %p65 = scmp.eq.s32.totalorder %s11, 0
      %p66 = por %p64, %p65
      %p67 = scmp.ne.s32.totalorder %s59, %s61
      %p68 = scmp.eq.s32.totalorder %s16, 1
      %p69 = por %p67, %p68
      %p70 = scmp.ne.s32.totalorder %s61, %s62
      %p71 = scmp.eq.s32.totalorder %s16, 0
      %p72 = por %p70, %p71
      %p73 = scmp.ne.s32.totalorder %s61, %s62
      %p74 = scmp.eq.s32.totalorder %s17, 1
      %p75 = por %p73, %p74
      %p77 = scmp.ne.s32.totalorder %s62, %s76
      %p78 = scmp.eq.s32.totalorder %s17, 0
      %p79 = por %p77, %p78
      %s80 = ssub.s32 %s18, %s30
      %s81 = ssub.s32 %s19, %s26
      %s82 = sor.u32 %s80, %s81
      %p83 = scmp.eq.s32.totalorder %s82, 0
      %s85 = sadd.s32 %s84, 1
      %s86 = scalar_select %p83, %s84, %s85
      %p89 = pneg %p83
      %p90 = scmp.eq.s32.totalorder %s11, 1
      %p91 = por %p89, %p90
      %p92 = scmp.ne.s32.totalorder %s84, %s87
      %p93 = scmp.eq.s32.totalorder %s11, 0
      %p94 = por %p92, %p93
      %p95 = scmp.ne.s32.totalorder %s84, %s87
      %p96 = scmp.eq.s32.totalorder %s16, 1
      %p97 = por %p95, %p96
      %p98 = scmp.ne.s32.totalorder %s87, %s88
      %p99 = scmp.eq.s32.totalorder %s16, 0
      %p100 = por %p98, %p99
      %p101 = scmp.ne.s32.totalorder %s87, %s88
      %p102 = scmp.eq.s32.totalorder %s17, 1
      %p103 = por %p101, %p102
      %p105 = scmp.ne.s32.totalorder %s88, %s104
      %p106 = scmp.eq.s32.totalorder %s17, 0
      %p107 = por %p105, %p106
      %p108 = scmp.le.s32.totalorder 1, %s11
      %p109 = scmp.lt.s32.totalorder %s11, 3
      %p110 = pnand %p108, %p109
      %p111 = pneg %p110
      // Predicated region
      $region9: #{tpu_custom_call.1} parent=5 // pred_check
        _
      $region10: #{tpu_custom_call.1} parent=5 // pred_check_branch
        %113 = sbr.rel (%p110) target = $region12
      $region11: #{tpu_custom_call.1} parent=5 // pred_region
        %s114 = ssub.s32 %s11, 1
        // Predicated region
        $region13: #{tpu_custom_call.1} parent=11 // pred_check
          %p115 = pneg %p72
        $region14: #{tpu_custom_call.1} parent=11 // pred_check_branch
          %117 = sbr.rel (%p115) target = $region16
        $region15: #{tpu_custom_call.1} parent=11 // pred_region
          _
        $region16: #{tpu_custom_call.1} parent=11 // pred_fallthru
          _
      $region12: #{tpu_custom_call.1} parent=5 // pred_fallthru
        _
      %p118 = scmp.lt.s32.totalorder %s11, 2
      // Predicated region
      $region17: #{tpu_custom_call.1} parent=5 // pred_check
        %p119 = pneg %p118
      $region18: #{tpu_custom_call.1} parent=5 // pred_check_branch
        %121 = sbr.rel (%p119) target = $region20
      $region19: #{tpu_custom_call.1} parent=5 // pred_region
        // Predicated region
        $region21: #{tpu_custom_call.1} parent=19 // pred_check
          %p122 = pneg %p45
        $region22: #{tpu_custom_call.1} parent=19 // pred_check_branch
          %124 = sbr.rel (%p122) target = $region24
        $region23: #{tpu_custom_call.1} parent=19 // pred_region
          %s125 = smul.u32 2, %s19
          %p126 = scmp.lt.s32.totalorder %s18, 1
          %s127 = scalar_select %p126, %s18, 1
          %p128 = scmp.lt.s32.totalorder %s125, 1
          %s129 = scalar_select %p128, %s125, 1
          %s130 = smul.addr %s127, 2
          %s131 = sadd.s32 %s129, %s130
          %s132 = smul.addr %s131, 4
          %s133 = scalar_lea.vmem %s0, %s132
          %s134 = smul.u32 2, %s19
        $region24: #{tpu_custom_call.1} parent=19 // pred_fallthru
          _
      $region20: #{tpu_custom_call.1} parent=5 // pred_fallthru
        _
      %p135 = scmp.le.s32.totalorder 1, %s11
      %p136 = scmp.lt.s32.totalorder %s11, 3
      %p137 = pnand %p135, %p136
      %p138 = pneg %p137
      // Predicated region
      $region25: #{tpu_custom_call.1} parent=5 // pred_check
        _
      $region26: #{tpu_custom_call.1} parent=5 // pred_check_branch
        %140 = sbr.rel (%p137) target = $region28
      $region27: #{tpu_custom_call.1} parent=5 // pred_region
        %s141 = ssub.s32 %s11, 1
        %s142 = smul.u32 2, %s21
        %p143 = scmp.lt.s32.totalorder %s20, 1
        %s144 = scalar_select %p143, %s20, 1
        %p145 = scmp.lt.s32.totalorder %s142, 1
        %s146 = scalar_select %p145, %s142, 1
        %s147 = smul.addr %s144, 2
        %s148 = sadd.s32 %s146, %s147
        %s149 = smul.addr %s148, 4
        %s150 = scalar_lea.vmem %s0, %s149
        %p151 = pneg %p51
        %p152 = pneg %p48
        %p153 = pneg %p72
        %p154 = pneg %p69
        %p155 = pneg %p100
        %p156 = pneg %p97
        %s157 = sand.u32 %s87, 1
        %s158 = scalar_lea.sflag [#allocation3], %s157
        %s159 = sand.u32 %s87, 1
        %s160 = smul.addr %s159, 8
        %s161 = scalar_lea.vmem [#allocation2], %s160
        %s162 = smul.u32 2, %s21
        %p163 = scmp.lt.s32.totalorder %s20, 1
        %s164 = scalar_select %p163, %s20, 1
        %p165 = scmp.lt.s32.totalorder %s162, 1
        %s166 = scalar_select %p165, %s162, 1
        %s167 = smul.addr %s164, 2
        %s168 = sadd.s32 %s166, %s167
        %s169 = smul.addr %s168, 4
        %s170 = scalar_lea.vmem %s0, %s169
        %s171 = smul.u32 2, %s21
        %s172 = smul.u32 2, %s21
        %v173 = vld [vmem:[%s170] sm:$0x77]
        %v174 = vld [vmem:[%s1] sm:$0x7]
        %176 = vset.pattern.permute.xlu0 0
        %177 = vperm.xlu0 %176, %v174
        %v178 = vpop.permute.xlu0 %177
        %v180 = vunpack.c.l.s4 839922192
        %v181 = vunpack.c.0.s8 %v180
        %v182 = vlaneseq
        %v183 = vshrl.u32 %v182, 7
        %v184 = vsub.s32 %v181, %v183
        %v185 = vrot.slane %v178, %v184
        %v187 = vadd.f32 %v173, %v185
        %v188 = vtanh.pop %v187
        %v189 = vadd.f32 %v188, 1.0
        %v190 = vmul.f32 %v189, 0.5
        %v192 = vcombine.high %v190, %v190
        %v193 = vrot.slane %v190, 7
        %v194 = vrot.slane %v192, 7
        %vm197 = vcmask 1040384
        %v198 = vsel %vm197, 1.0, %v193
        %v199 = vsel %vm197, 1.0, %v194
        %v202 = vcombine.low %v198, %v199
        %204 = vst [vmem:[%s161] sm:$0xff] %v202
        %s205 = sand.u32 %s87, 1
        %s206 = scalar_lea.sflag [#allocation3], %s205
        %s207 = sand.u32 %s87, 1
        %s208 = smul.addr %s207, 8
        %s209 = scalar_lea.vmem [#allocation2], %s208
        // Predicated region
        $region29: #{tpu_custom_call.1} parent=27 // pred_check
          %p210 = pneg %p97
        $region30: #{tpu_custom_call.1} parent=27 // pred_check_branch
          %212 = sbr.rel (%p210) target = $region32
        $region31: #{tpu_custom_call.1} parent=27 // pred_region
          %s213 = smul.u32 2, %s21
          %s215 = ssub.s32 128, 128
          %216 = vsyncadd %s206, %s215
          %s217 = smul.addr %s20, 2
          %s218 = sadd.s32 %s213, %s217
          %s219 = smul.addr %s218, 64
          %s220 = scalar_lea.hbm %s2, %s219
          %s222 = sshll.u32 %s209, 4
          %s223 = int_to_ptr.vmem [resolvable:$true] %s222
          %225 = dma.vmem_to_hbm [thread:$0]  %s223, 128, %s220, %s206
        $region32: #{tpu_custom_call.1} parent=27 // pred_fallthru
          _
      $region28: #{tpu_custom_call.1} parent=5 // pred_fallthru
        _
      %p226 = scmp.le.s32.totalorder 2, %s11
      // Predicated region
      $region33: #{tpu_custom_call.1} parent=5 // pred_check
        %p227 = pneg %p226
      $region34: #{tpu_custom_call.1} parent=5 // pred_check_branch
        %229 = sbr.rel (%p227) target = $region36
      $region35: #{tpu_custom_call.1} parent=5 // pred_region
        %s230 = ssub.s32 %s11, 2
        // Predicated region
        $region37: #{tpu_custom_call.1} parent=35 // pred_check
          %p231 = pneg %p103
        $region38: #{tpu_custom_call.1} parent=35 // pred_check_branch
          %233 = sbr.rel (%p231) target = $region40
        $region39: #{tpu_custom_call.1} parent=35 // pred_region
          %s234 = sand.u32 %s88, 1
          %s235 = scalar_lea.sflag [#allocation3], %s234
          %s236 = sand.u32 %s88, 1
          %s237 = smul.addr %s236, 8
          %s238 = scalar_lea.vmem [#allocation2], %s237
          %239 = dma.done %s235, 128
        $region40: #{tpu_custom_call.1} parent=35 // pred_fallthru
          _
      $region36: #{tpu_custom_call.1} parent=5 // pred_fallthru
        _
    $region6: #{tpu_custom_call.1} parent=1 // loop_footer
      %s15 = sadd.s32 1, %s11
    $region7: #{tpu_custom_call.1} parent=1 // loop_footer_branch
      %10 = sbr.rel target = $region3
    $region8: #{tpu_custom_call.1} parent=1 // loop_exit
      _
    %240 = vsyncpa [#allocation3], 1
    %s241 = scalar_lea.sflag [#allocation3], 1
    %242 = vsyncpa %s241, 1

</llo_original>
